<compile_context>
chip_gen: v5e
topology: v5e:2x2
jax: 0.10.0
libtpu: 0.0.40
codegen_flags: <defaults>
</compile_context>

<pallas_src>
import functools

import jax
import jax.numpy as jnp
from jax.experimental import pallas as pl
from jax.experimental.pallas import tpu as pltpu


def _round_up(x, m):
    return ((x + m - 1) // m) * m


def _mlp_kernel(x_ref, w1_ref, w2_ref, o_ref, acc_ref):
    h_idx = pl.program_id(1)

    @pl.when(h_idx == 0)
    def _():
        acc_ref[...] = jnp.zeros_like(acc_ref)

    # fc1 chunk: (tm, Cin) @ (Cin, hk) -> (tm, hk), f32 accumulation on MXU.
    h = jnp.dot(x_ref[...], w1_ref[...], preferred_element_type=jnp.float32)
    # Activation: ReLU on the VPU. Dropout(p=0.0) is the identity.
    h = jnp.maximum(h, 0.0)
    # fc2 chunk: accumulate (tm, hk) @ (hk, Cout) into the resident f32 scratch.
    acc_ref[...] += jnp.dot(
        h.astype(w2_ref.dtype), w2_ref[...], preferred_element_type=jnp.float32
    )

    @pl.when(h_idx == pl.num_programs(1) - 1)
    def _():
        o_ref[...] = acc_ref[...].astype(o_ref.dtype)


@functools.partial(jax.jit, static_argnames=("block_rows", "block_hidden"))
def mlp_forward(x, w1, w2, *, block_rows=256, block_hidden=512):
    """x: (B, S, C_in); w1: (C_in, H); w2: (H, C_out). Returns (B, S, C_out)."""
    B, S, C_in = x.shape
    H = w1.shape[1]
    C_out = w2.shape[1]

    n_rows = B * S
    x2d = x.reshape(n_rows, C_in)

    # Lane-align every block's last dim to 128; row-align tiles to the MXU.
    cin_p = _round_up(C_in, 128)
    cout_p = _round_up(C_out, 128)
    h_p = _round_up(H, 128)
    hk = min(block_hidden, h_p)          # hidden-chunk size per grid step
    h_p = _round_up(h_p, hk)

    bm = min(block_rows, _round_up(n_rows, 128))   # row-tile size (>=128)
    rows_p = _round_up(n_rows, bm)

    # Zero padding keeps the math exact; padded rows/cols are sliced off.
    x_p = jnp.pad(x2d, ((0, rows_p - n_rows), (0, cin_p - C_in)))
    w1_p = jnp.pad(w1, ((0, cin_p - C_in), (0, h_p - H)))
    w2_p = jnp.pad(w2, ((0, h_p - H), (0, cout_p - C_out)))

    grid = (rows_p // bm, h_p // hk)

    out_p = pl.pallas_call(
        _mlp_kernel,
        out_shape=jax.ShapeDtypeStruct((rows_p, cout_p), x.dtype),
        grid_spec=pltpu.PrefetchScalarGridSpec(
            num_scalar_prefetch=0,
            grid=grid,
            in_specs=[
                # row tile of the activations (constant block across h-axis)
                pl.BlockSpec((bm, cin_p), lambda i, h: (i, 0)),
                # streamed hidden-chunk of fc1 weights
                pl.BlockSpec((cin_p, hk), lambda i, h: (0, h)),
                # streamed hidden-chunk of fc2 weights
                pl.BlockSpec((hk, cout_p), lambda i, h: (h, 0)),
            ],
            out_specs=pl.BlockSpec((bm, cout_p), lambda i, h: (i, 0)),
            scratch_shapes=[pltpu.VMEM((bm, cout_p), jnp.float32)],
        ),
        compiler_params=pltpu.CompilerParams(
            # rows embarrassingly parallel (sharded across TCs on v7x);
            # hidden-chunk axis is a reduction -> arbitrary, and last in grid.
            dimension_semantics=("parallel", "arbitrary"),
        ),
    )(x_p, w1_p, w2_p)

    return out_p[:n_rows, :C_out].reshape(B, S, C_out)


def _reference(x, w1, w2):
    h = jnp.maximum(jnp.einsum("bsc,ch->bsh", x, w1), 0.0)
    return jnp.einsum("bsh,ho->bso", h, w2)


if __name__ == "__main__":
    # Small shapes consistent with the module: batch=2, seq=8, in=32, hidden=64
    B, S, C_in, H = 2, 8, 32, 64
    C_out = C_in  # out_features defaults to in_features

    key = jax.random.PRNGKey(0)
    kx, k1, k2 = jax.random.split(key, 3)

    x = jax.random.normal(kx, (B, S, C_in), dtype=jnp.float32)
    # PyTorch stores Linear weight as (out, in); build that way, transpose
    # to (in, out) for the kernel's row-major matmuls.
    w1_pt = jax.random.normal(k1, (H, C_in), dtype=jnp.float32) * (1.0 / C_in) ** 0.5
    w2_pt = jax.random.normal(k2, (C_out, H), dtype=jnp.float32) * (1.0 / H) ** 0.5
    w1 = w1_pt.T  # (C_in, H)
    w2 = w2_pt.T  # (H, C_out)

    y = mlp_forward(x, w1, w2)
    jax.block_until_ready(y)

    y_ref = _reference(x, w1, w2)
    assert y.shape == (B, S, C_out)
    assert jnp.allclose(y, y_ref, atol=1e-4, rtol=1e-4), "mismatch vs reference"

    # Exercise the row-padding path (non-multiple token count, like ViT's 197).
    x_odd = jax.random.normal(kx, (B, 7, C_in), dtype=jnp.float32)
    y_odd = mlp_forward(x_odd, w1, w2)
    jax.block_until_ready(y_odd)
    y_odd_ref = _reference(x_odd, w1, w2)
    assert y_odd.shape == (B, 7, C_out)
    assert jnp.allclose(y_odd, y_odd_ref, atol=1e-4, rtol=1e-4), "padded mismatch"

    print("KERNEL_OK")
</pallas_src>

<mosaic_0001>
module attributes {stable_mosaic.version = 11 : i64} {
  func.func @_mlp_kernel(%arg0: i32, %arg1: i32, %arg2: memref<128x128xf32, #tpu.memory_space<vmem>>, %arg3: memref<128x128xf32, #tpu.memory_space<vmem>>, %arg4: memref<128x128xf32, #tpu.memory_space<vmem>>, %arg5: memref<128x128xf32, #tpu.memory_space<vmem>>, %arg6: memref<128x128xf32, #tpu.memory_space<vmem>>) attributes {dimension_semantics = [#tpu.dimension_semantics<parallel>, #tpu.dimension_semantics<arbitrary>], iteration_bounds = array<i64: 1, 1>, scalar_prefetch = 0 : i64, scratch_operands = 1 : i64, tpu.core_type = #tpu.core_type<tc>, window_params = [{transform_indices = @transform_0, window_bounds = array<i64: 128, 128>}, {transform_indices = @transform_1, window_bounds = array<i64: 128, 128>}, {transform_indices = @transform_2, window_bounds = array<i64: 128, 128>}, {transform_indices = @transform_3, window_bounds = array<i64: 128, 128>}]} {
    %c0_i32 = arith.constant 0 : i32
    %0 = arith.cmpi eq, %arg1, %c0_i32 : i32
    %1 = arith.extui %0 : i1 to i32
    %c0_i32_0 = arith.constant 0 : i32
    %2 = arith.cmpi ne, %1, %c0_i32_0 : i32
    scf.if %2 {
      %cst_14 = arith.constant 0.000000e+00 : f32
      %16 = vector.broadcast %cst_14 : f32 to vector<128x128xf32>
      %c0_15 = arith.constant 0 : index
      %c0_16 = arith.constant 0 : index
      %17 = vector.load %arg6[%c0_15, %c0_16] : memref<128x128xf32, #tpu.memory_space<vmem>>, vector<128x128xf32>
      tpu.vector_store %arg6[%c0_15, %c0_16], %16 {strides = array<i32>} : memref<128x128xf32, #tpu.memory_space<vmem>>, vector<128x128xf32>,
    } else {
    }
    %c0 = arith.constant 0 : index
    %c0_1 = arith.constant 0 : index
    %3 = vector.load %arg2[%c0, %c0_1] : memref<128x128xf32, #tpu.memory_space<vmem>>, vector<128x128xf32>
    %c0_2 = arith.constant 0 : index
    %c0_3 = arith.constant 0 : index
    %4 = vector.load %arg3[%c0_2, %c0_3] : memref<128x128xf32, #tpu.memory_space<vmem>>, vector<128x128xf32>
    %cst = arith.constant dense<0.000000e+00> : vector<128x128xf32>
    %5 = tpu.matmul %3, %4, %cst {dimension_numbers = #tpu.dot_dimension_numbers<[1], [0], [0], [1], [0, 0, 1, 1], [], []>} : vector<128x128xf32>, vector<128x128xf32>, vector<128x128xf32> -> vector<128x128xf32>
    %cst_4 = arith.constant 0.000000e+00 : f32
    %6 = vector.broadcast %cst_4 : f32 to vector<128x128xf32>
    %7 = arith.maximumf %5, %6 : vector<128x128xf32>
    %c0_5 = arith.constant 0 : index
    %c0_6 = arith.constant 0 : index
    %8 = vector.load %arg6[%c0_5, %c0_6] : memref<128x128xf32, #tpu.memory_space<vmem>>, vector<128x128xf32>
    %c0_7 = arith.constant 0 : index
    %c0_8 = arith.constant 0 : index
    %9 = vector.load %arg4[%c0_7, %c0_8] : memref<128x128xf32, #tpu.memory_space<vmem>>, vector<128x128xf32>
    %cst_9 = arith.constant dense<0.000000e+00> : vector<128x128xf32>
    %10 = tpu.matmul %7, %9, %cst_9 {dimension_numbers = #tpu.dot_dimension_numbers<[1], [0], [0], [1], [0, 0, 1, 1], [], []>} : vector<128x128xf32>, vector<128x128xf32>, vector<128x128xf32> -> vector<128x128xf32>
    %11 = arith.addf %8, %10 : vector<128x128xf32>
    %c0_10 = arith.constant 0 : index
    %c0_11 = arith.constant 0 : index
    %12 = vector.load %arg6[%c0_10, %c0_11] : memref<128x128xf32, #tpu.memory_space<vmem>>, vector<128x128xf32>
    tpu.vector_store %arg6[%c0_10, %c0_11], %11 {strides = array<i32>} : memref<128x128xf32, #tpu.memory_space<vmem>>, vector<128x128xf32>,
    %c0_i32_12 = arith.constant 0 : i32
    %13 = arith.cmpi eq, %arg1, %c0_i32_12 : i32
    %14 = arith.extui %13 : i1 to i32
    %c0_i32_13 = arith.constant 0 : i32
    %15 = arith.cmpi ne, %14, %c0_i32_13 : i32
    scf.if %15 {
      %c0_14 = arith.constant 0 : index
      %c0_15 = arith.constant 0 : index
      %16 = vector.load %arg6[%c0_14, %c0_15] : memref<128x128xf32, #tpu.memory_space<vmem>>, vector<128x128xf32>
      %c0_16 = arith.constant 0 : index
      %c0_17 = arith.constant 0 : index
      %17 = vector.load %arg5[%c0_16, %c0_17] : memref<128x128xf32, #tpu.memory_space<vmem>>, vector<128x128xf32>
      tpu.vector_store %arg5[%c0_16, %c0_17], %16 {strides = array<i32>} : memref<128x128xf32, #tpu.memory_space<vmem>>, vector<128x128xf32>,
    } else {
    }
    return
  }
  func.func @transform_0(%arg0: i32, %arg1: i32) -> (i32, i32) {
    %c0_i32 = arith.constant 0 : i32
    %c0_i32_0 = arith.constant 0 : i32
    return %arg0, %c0_i32 : i32, i32
  }
  func.func @transform_1(%arg0: i32, %arg1: i32) -> (i32, i32) {
    %c0_i32 = arith.constant 0 : i32
    %c0_i32_0 = arith.constant 0 : i32
    return %c0_i32, %arg1 : i32, i32
  }
  func.func @transform_2(%arg0: i32, %arg1: i32) -> (i32, i32) {
    %c0_i32 = arith.constant 0 : i32
    %c0_i32_0 = arith.constant 0 : i32
    return %arg1, %c0_i32 : i32, i32
  }
  func.func @transform_3(%arg0: i32, %arg1: i32) -> (i32, i32) {
    %c0_i32 = arith.constant 0 : i32
    %c0_i32_0 = arith.constant 0 : i32
    return %arg0, %c0_i32 : i32, i32
  }
}

</mosaic_0001>

<llo_original>
// kernel: mlp_forward.1
$region0: #{mlp_forward.1}
  #allocation0 [shape = 'u32[]', space=smem, size = 0x4, offset = 0x4, fixed_abs, tag = 'smem constant byte address 0x4 - core index']
  #allocation1 [shape = 'u32[72,128]{1,0:T(1,128)}', space=vmem, size = 0x9000, scoped, tag = 'internal scratch']
  #allocation2 [shape = 'f32[128,128]{1,0:T(8,128)}', space=vmem, size = 0x10000, scoped, tag = 'scratch operand']
  %s0 = inlined_call_operand.vmem [shape: f32[128,128], index: 0, kind: input, shape index: {}]
  %s1 = inlined_call_operand.vmem [shape: f32[128,128], index: 1, kind: input, shape index: {}]
  %s2 = inlined_call_operand.vmem [shape: f32[128,128], index: 2, kind: input, shape index: {}]
  %s3 = inlined_call_operand.vmem [shape: f32[128,128], index: 3, kind: output, shape index: {}]
  %s4 = sld [smem:[#allocation0]]
  $region30: #{mlp_forward.1} parent=0
    _
  %s6 = ssub.s32 1, %s4
  %s7 = scalar_select 0, %s6, %s4
  // Predicated region
  $region2: #{mlp_forward.1} parent=0 // pred_check
    _
  $region3: #{mlp_forward.1} parent=0 // pred_check_branch
    %9 = sbr.rel (0) target = $region5
  $region4: #{mlp_forward.1} parent=0 // pred_region
    _
  $region5: #{mlp_forward.1} parent=0 // pred_fallthru
    _
  // Predicated region
  $region6: #{mlp_forward.1} parent=0 // pred_check
    _
  $region7: #{mlp_forward.1} parent=0 // pred_check_branch
    %11 = sbr.rel (0) target = $region9
  $region8: #{mlp_forward.1} parent=0 // pred_region
    _
  $region9: #{mlp_forward.1} parent=0 // pred_fallthru
    _
  // Predicated region
  $region10: #{mlp_forward.1} parent=0 // pred_check
    _
  $region11: #{mlp_forward.1} parent=0 // pred_check_branch
    %13 = sbr.rel (0) target = $region13
  $region12: #{mlp_forward.1} parent=0 // pred_region
    _
  $region13: #{mlp_forward.1} parent=0 // pred_fallthru
    _
  %p14 = scmp.eq.s32.totalorder 0, 0
  // Predicated region
  $region14: #{mlp_forward.1} parent=0 // pred_check
    %p15 = pneg %p14
  $region15: #{mlp_forward.1} parent=0 // pred_check_branch
    %17 = sbr.rel (%p15) target = $region17
  $region16: #{mlp_forward.1} parent=0 // pred_region
    %18 = vst [vmem:[#allocation2] sm:$0xff] 0.0
    %19 = vst [vmem:[#allocation2 + $0x8] sm:$0xff] 0.0
    %20 = vst [vmem:[#allocation2 + $0x10] sm:$0xff] 0.0
    %21 = vst [vmem:[#allocation2 + $0x18] sm:$0xff] 0.0
    %22 = vst [vmem:[#allocation2 + $0x20] sm:$0xff] 0.0
    %23 = vst [vmem:[#allocation2 + $0x28] sm:$0xff] 0.0
    %24 = vst [vmem:[#allocation2 + $0x30] sm:$0xff] 0.0
    %25 = vst [vmem:[#allocation2 + $0x38] sm:$0xff] 0.0
    %26 = vst [vmem:[#allocation2 + $0x40] sm:$0xff] 0.0
    %27 = vst [vmem:[#allocation2 + $0x48] sm:$0xff] 0.0
    %28 = vst [vmem:[#allocation2 + $0x50] sm:$0xff] 0.0
    %29 = vst [vmem:[#allocation2 + $0x58] sm:$0xff] 0.0
    %30 = vst [vmem:[#allocation2 + $0x60] sm:$0xff] 0.0
    %31 = vst [vmem:[#allocation2 + $0x68] sm:$0xff] 0.0
    %32 = vst [vmem:[#allocation2 + $0x70] sm:$0xff] 0.0
    %33 = vst [vmem:[#allocation2 + $0x78] sm:$0xff] 0.0
  $region17: #{mlp_forward.1} parent=0 // pred_fallthru
    _
  %v34 = vld [vmem:[%s0] sm:$0xff]
  %v35 = vld [vmem:[%s0 + $0x8] sm:$0xff]
  %v36 = vld [vmem:[%s0 + $0x10] sm:$0xff]
  %v37 = vld [vmem:[%s0 + $0x18] sm:$0xff]
  %v38 = vld [vmem:[%s0 + $0x20] sm:$0xff]
  %v39 = vld [vmem:[%s0 + $0x28] sm:$0xff]
  %v40 = vld [vmem:[%s0 + $0x30] sm:$0xff]
  %v41 = vld [vmem:[%s0 + $0x38] sm:$0xff]
  %v42 = vld [vmem:[%s0 + $0x40] sm:$0xff]
  %v43 = vld [vmem:[%s0 + $0x48] sm:$0xff]
  %v44 = vld [vmem:[%s0 + $0x50] sm:$0xff]
  %v45 = vld [vmem:[%s0 + $0x58] sm:$0xff]
  %v46 = vld [vmem:[%s0 + $0x60] sm:$0xff]
  %v47 = vld [vmem:[%s0 + $0x68] sm:$0xff]
  %v48 = vld [vmem:[%s0 + $0x70] sm:$0xff]
  %v49 = vld [vmem:[%s0 + $0x78] sm:$0xff]
  %v50 = vld [vmem:[%s1] sm:$0xff]
  %v51 = vld [vmem:[%s1 + $0x8] sm:$0xff]
  %v52 = vld [vmem:[%s1 + $0x10] sm:$0xff]
  %v53 = vld [vmem:[%s1 + $0x18] sm:$0xff]
  %v54 = vld [vmem:[%s1 + $0x20] sm:$0xff]
  %v55 = vld [vmem:[%s1 + $0x28] sm:$0xff]
  %v56 = vld [vmem:[%s1 + $0x30] sm:$0xff]
  %v57 = vld [vmem:[%s1 + $0x38] sm:$0xff]
  %v58 = vld [vmem:[%s1 + $0x40] sm:$0xff]
  %v59 = vld [vmem:[%s1 + $0x48] sm:$0xff]
  %v60 = vld [vmem:[%s1 + $0x50] sm:$0xff]
  %v61 = vld [vmem:[%s1 + $0x58] sm:$0xff]
  %v62 = vld [vmem:[%s1 + $0x60] sm:$0xff]
  %v63 = vld [vmem:[%s1 + $0x68] sm:$0xff]
  %v64 = vld [vmem:[%s1 + $0x70] sm:$0xff]
  %v65 = vld [vmem:[%s1 + $0x78] sm:$0xff]
  %66 = vmatpush.msra.mxu0 %v65
  %67 = vmatpush.msra.mxu0 %v64
  %68 = vmatpush.msra.mxu0 %v63
  %69 = vmatpush.msra.mxu0 %v62
  %70 = vmatpush.msra.mxu0 %v61
  %71 = vmatpush.msra.mxu0 %v60
  %72 = vmatpush.msra.mxu0 %v59
  %73 = vmatpush.msra.mxu0 %v58
  %74 = vmatpush.msra.mxu0 %v57
  %75 = vmatpush.msra.mxu0 %v56
  %76 = vmatpush.msra.mxu0 %v55
  %77 = vmatpush.msra.mxu0 %v54
  %78 = vmatpush.msra.mxu0 %v53
  %79 = vmatpush.msra.mxu0 %v52
  %80 = vmatpush.msra.mxu0 %v51
  %81 = vmatpush.msra.mxu0 %v50
  %82 = vmatmul.f32.gmra.mxu0 %v34
  %v83 = vpop.f32.mrf.mxu0
  %v84 = vadd.f32 0.0, %v83
  %85 = vmatmul.f32.gmra.mxu0 %v35
  %v86 = vpop.f32.mrf.mxu0
  %v87 = vadd.f32 0.0, %v86
  %88 = vmatmul.f32.gmra.mxu0 %v36
  %v89 = vpop.f32.mrf.mxu0
  %v90 = vadd.f32 0.0, %v89
  %91 = vmatmul.f32.gmra.mxu0 %v37
  %v92 = vpop.f32.mrf.mxu0
  %v93 = vadd.f32 0.0, %v92
  %94 = vmatmul.f32.gmra.mxu0 %v38
  %v95 = vpop.f32.mrf.mxu0
  %v96 = vadd.f32 0.0, %v95
  %97 = vmatmul.f32.gmra.mxu0 %v39
  %v98 = vpop.f32.mrf.mxu0
  %v99 = vadd.f32 0.0, %v98
  %100 = vmatmul.f32.gmra.mxu0 %v40
  %v101 = vpop.f32.mrf.mxu0
  %v102 = vadd.f32 0.0, %v101
  %103 = vmatmul.f32.gmra.mxu0 %v41
  %v104 = vpop.f32.mrf.mxu0
  %v105 = vadd.f32 0.0, %v104
  %106 = vmatmul.f32.gmra.mxu0 %v42
  %v107 = vpop.f32.mrf.mxu0
  %v108 = vadd.f32 0.0, %v107
  %109 = vmatmul.f32.gmra.mxu0 %v43
  %v110 = vpop.f32.mrf.mxu0
  %v111 = vadd.f32 0.0, %v110
  %112 = vmatmul.f32.gmra.mxu0 %v44
  %v113 = vpop.f32.mrf.mxu0
  %v114 = vadd.f32 0.0, %v113
  %115 = vmatmul.f32.gmra.mxu0 %v45
  %v116 = vpop.f32.mrf.mxu0
  %v117 = vadd.f32 0.0, %v116
  %118 = vmatmul.f32.gmra.mxu0 %v46
  %v119 = vpop.f32.mrf.mxu0
  %v120 = vadd.f32 0.0, %v119
  %121 = vmatmul.f32.gmra.mxu0 %v47
  %v122 = vpop.f32.mrf.mxu0
  %v123 = vadd.f32 0.0, %v122
  %124 = vmatmul.f32.gmra.mxu0 %v48
  %v125 = vpop.f32.mrf.mxu0
  %v126 = vadd.f32 0.0, %v125
  %127 = vmatmul.f32.gmra.mxu0 %v49
  %v128 = vpop.f32.mrf.mxu0
  %v129 = vadd.f32 0.0, %v128
  %130 = vdwg.mxu0
  %v131 = vmax.f32 %v84, 0.0
  %v132 = vmax.f32 %v87, 0.0
  %v133 = vmax.f32 %v90, 0.0
  %v134 = vmax.f32 %v93, 0.0
  %v135 = vmax.f32 %v96, 0.0
  %v136 = vmax.f32 %v99, 0.0
  %v137 = vmax.f32 %v102, 0.0
  %v138 = vmax.f32 %v105, 0.0
  %v139 = vmax.f32 %v108, 0.0
  %v140 = vmax.f32 %v111, 0.0
  %v141 = vmax.f32 %v114, 0.0
  %v142 = vmax.f32 %v117, 0.0
  %v143 = vmax.f32 %v120, 0.0
  %v144 = vmax.f32 %v123, 0.0
  %v145 = vmax.f32 %v126, 0.0
  %v146 = vmax.f32 %v129, 0.0
  %v147 = vld [vmem:[#allocation2] sm:$0xff]
  %v148 = vld [vmem:[#allocation2 + $0x8] sm:$0xff]
  %v149 = vld [vmem:[#allocation2 + $0x10] sm:$0xff]
  %v150 = vld [vmem:[#allocation2 + $0x18] sm:$0xff]
  %v151 = vld [vmem:[#allocation2 + $0x20] sm:$0xff]
  %v152 = vld [vmem:[#allocation2 + $0x28] sm:$0xff]
  %v153 = vld [vmem:[#allocation2 + $0x30] sm:$0xff]
  %v154 = vld [vmem:[#allocation2 + $0x38] sm:$0xff]
  %v155 = vld [vmem:[#allocation2 + $0x40] sm:$0xff]
  %v156 = vld [vmem:[#allocation2 + $0x48] sm:$0xff]
  %v157 = vld [vmem:[#allocation2 + $0x50] sm:$0xff]
  %v158 = vld [vmem:[#allocation2 + $0x58] sm:$0xff]
  %v159 = vld [vmem:[#allocation2 + $0x60] sm:$0xff]
  %v160 = vld [vmem:[#allocation2 + $0x68] sm:$0xff]
  %v161 = vld [vmem:[#allocation2 + $0x70] sm:$0xff]
  %v162 = vld [vmem:[#allocation2 + $0x78] sm:$0xff]
  %v163 = vld [vmem:[%s2] sm:$0xff]
  %v164 = vld [vmem:[%s2 + $0x8] sm:$0xff]
  %v165 = vld [vmem:[%s2 + $0x10] sm:$0xff]
  %v166 = vld [vmem:[%s2 + $0x18] sm:$0xff]
  %v167 = vld [vmem:[%s2 + $0x20] sm:$0xff]
  %v168 = vld [vmem:[%s2 + $0x28] sm:$0xff]
  %v169 = vld [vmem:[%s2 + $0x30] sm:$0xff]
  %v170 = vld [vmem:[%s2 + $0x38] sm:$0xff]
  %v171 = vld [vmem:[%s2 + $0x40] sm:$0xff]
  %v172 = vld [vmem:[%s2 + $0x48] sm:$0xff]
  %v173 = vld [vmem:[%s2 + $0x50] sm:$0xff]
  %v174 = vld [vmem:[%s2 + $0x58] sm:$0xff]
  %v175 = vld [vmem:[%s2 + $0x60] sm:$0xff]
  %v176 = vld [vmem:[%s2 + $0x68] sm:$0xff]
  %v177 = vld [vmem:[%s2 + $0x70] sm:$0xff]
  %v178 = vld [vmem:[%s2 + $0x78] sm:$0xff]
  %179 = vmatpush.msra.mxu0 %v178
  %180 = vmatpush.msra.mxu0 %v177
  %181 = vmatpush.msra.mxu0 %v176
  %182 = vmatpush.msra.mxu0 %v175
  %183 = vmatpush.msra.mxu0 %v174
  %184 = vmatpush.msra.mxu0 %v173
  %185 = vmatpush.msra.mxu0 %v172
  %186 = vmatpush.msra.mxu0 %v171
  %187 = vmatpush.msra.mxu0 %v170
  %188 = vmatpush.msra.mxu0 %v169
  %189 = vmatpush.msra.mxu0 %v168
  %190 = vmatpush.msra.mxu0 %v167
  %191 = vmatpush.msra.mxu0 %v166
  %192 = vmatpush.msra.mxu0 %v165
  %193 = vmatpush.msra.mxu0 %v164
  %194 = vmatpush.msra.mxu0 %v163
  %195 = vmatmul.f32.gmra.mxu0 %v131
  %v196 = vpop.f32.mrf.mxu0
  %v197 = vadd.f32 0.0, %v196
  %198 = vmatmul.f32.gmra.mxu0 %v132
  %v199 = vpop.f32.mrf.mxu0
  %v200 = vadd.f32 0.0, %v199
  %201 = vmatmul.f32.gmra.mxu0 %v133
  %v202 = vpop.f32.mrf.mxu0
  %v203 = vadd.f32 0.0, %v202
  %204 = vmatmul.f32.gmra.mxu0 %v134
  %v205 = vpop.f32.mrf.mxu0
  %v206 = vadd.f32 0.0, %v205
  %207 = vmatmul.f32.gmra.mxu0 %v135
  %v208 = vpop.f32.mrf.mxu0
  %v209 = vadd.f32 0.0, %v208
  %210 = vmatmul.f32.gmra.mxu0 %v136
  %v211 = vpop.f32.mrf.mxu0
  %v212 = vadd.f32 0.0, %v211
  %213 = vmatmul.f32.gmra.mxu0 %v137
  %v214 = vpop.f32.mrf.mxu0
  %v215 = vadd.f32 0.0, %v214
  %216 = vmatmul.f32.gmra.mxu0 %v138
  %v217 = vpop.f32.mrf.mxu0
  %v218 = vadd.f32 0.0, %v217
  %219 = vmatmul.f32.gmra.mxu0 %v139
  %v220 = vpop.f32.mrf.mxu0
  %v221 = vadd.f32 0.0, %v220
  %222 = vmatmul.f32.gmra.mxu0 %v140
  %v223 = vpop.f32.mrf.mxu0
  %v224 = vadd.f32 0.0, %v223
  %225 = vmatmul.f32.gmra.mxu0 %v141
  %v226 = vpop.f32.mrf.mxu0
  %v227 = vadd.f32 0.0, %v226
  %228 = vmatmul.f32.gmra.mxu0 %v142
  %v229 = vpop.f32.mrf.mxu0
  %v230 = vadd.f32 0.0, %v229
  %231 = vmatmul.f32.gmra.mxu0 %v143
  %v232 = vpop.f32.mrf.mxu0
  %v233 = vadd.f32 0.0, %v232
  %234 = vmatmul.f32.gmra.mxu0 %v144
  %v235 = vpop.f32.mrf.mxu0
  %v236 = vadd.f32 0.0, %v235
  %237 = vmatmul.f32.gmra.mxu0 %v145
  %v238 = vpop.f32.mrf.mxu0
  %v239 = vadd.f32 0.0, %v238
  %240 = vmatmul.f32.gmra.mxu0 %v146
  %v241 = vpop.f32.mrf.mxu0
  %v242 = vadd.f32 0.0, %v241
  %243 = vdwg.mxu0
  %v244 = vadd.f32 %v147, %v197
  %v245 = vadd.f32 %v148, %v200
  %v246 = vadd.f32 %v149, %v203
  %v247 = vadd.f32 %v150, %v206
  %v248 = vadd.f32 %v151, %v209
  %v249 = vadd.f32 %v152, %v212
  %v250 = vadd.f32 %v153, %v215
  %v251 = vadd.f32 %v154, %v218
  %v252 = vadd.f32 %v155, %v221
  %v253 = vadd.f32 %v156, %v224
  %v254 = vadd.f32 %v157, %v227
  %v255 = vadd.f32 %v158, %v230
  %v256 = vadd.f32 %v159, %v233
  %v257 = vadd.f32 %v160, %v236
  %v258 = vadd.f32 %v161, %v239
  %v259 = vadd.f32 %v162, %v242
  %260 = vst [vmem:[#allocation2] sm:$0xff] %v244
  %261 = vst [vmem:[#allocation2 + $0x8] sm:$0xff] %v245
  %262 = vst [vmem:[#allocation2 + $0x10] sm:$0xff] %v246
  %263 = vst [vmem:[#allocation2 + $0x18] sm:$0xff] %v247
  %264 = vst [vmem:[#allocation2 + $0x20] sm:$0xff] %v248
  %265 = vst [vmem:[#allocation2 + $0x28] sm:$0xff] %v249
  %266 = vst [vmem:[#allocation2 + $0x30] sm:$0xff] %v250
  %267 = vst [vmem:[#allocation2 + $0x38] sm:$0xff] %v251
  %268 = vst [vmem:[#allocation2 + $0x40] sm:$0xff] %v252
  %269 = vst [vmem:[#allocation2 + $0x48] sm:$0xff] %v253
  %270 = vst [vmem:[#allocation2 + $0x50] sm:$0xff] %v254
  %271 = vst [vmem:[#allocation2 + $0x58] sm:$0xff] %v255
  %272 = vst [vmem:[#allocation2 + $0x60] sm:$0xff] %v256
  %273 = vst [vmem:[#allocation2 + $0x68] sm:$0xff] %v257
  %274 = vst [vmem:[#allocation2 + $0x70] sm:$0xff] %v258
  %275 = vst [vmem:[#allocation2 + $0x78] sm:$0xff] %v259
  // Predicated region
  $region18: #{mlp_forward.1} parent=0 // pred_check
    %p276 = pneg %p14
  $region19: #{mlp_forward.1} parent=0 // pred_check_branch
    %278 = sbr.rel (%p276) target = $region21
  $region20: #{mlp_forward.1} parent=0 // pred_region
    %v279 = vld [vmem:[#allocation2] sm:$0xff]
    %v280 = vld [vmem:[#allocation2 + $0x8] sm:$0xff]
    %v281 = vld [vmem:[#allocation2 + $0x10] sm:$0xff]
    %v282 = vld [vmem:[#allocation2 + $0x18] sm:$0xff]
    %v283 = vld [vmem:[#allocation2 + $0x20] sm:$0xff]
    %v284 = vld [vmem:[#allocation2 + $0x28] sm:$0xff]
    %v285 = vld [vmem:[#allocation2 + $0x30] sm:$0xff]
    %v286 = vld [vmem:[#allocation2 + $0x38] sm:$0xff]
    %v287 = vld [vmem:[#allocation2 + $0x40] sm:$0xff]
    %v288 = vld [vmem:[#allocation2 + $0x48] sm:$0xff]
    %v289 = vld [vmem:[#allocation2 + $0x50] sm:$0xff]
    %v290 = vld [vmem:[#allocation2 + $0x58] sm:$0xff]
    %v291 = vld [vmem:[#allocation2 + $0x60] sm:$0xff]
    %v292 = vld [vmem:[#allocation2 + $0x68] sm:$0xff]
    %v293 = vld [vmem:[#allocation2 + $0x70] sm:$0xff]
    %v294 = vld [vmem:[#allocation2 + $0x78] sm:$0xff]
    %295 = vst [vmem:[%s3] sm:$0xff] %v279
    %296 = vst [vmem:[%s3 + $0x8] sm:$0xff] %v280
    %297 = vst [vmem:[%s3 + $0x10] sm:$0xff] %v281
    %298 = vst [vmem:[%s3 + $0x18] sm:$0xff] %v282
    %299 = vst [vmem:[%s3 + $0x20] sm:$0xff] %v283
    %300 = vst [vmem:[%s3 + $0x28] sm:$0xff] %v284
    %301 = vst [vmem:[%s3 + $0x30] sm:$0xff] %v285
    %302 = vst [vmem:[%s3 + $0x38] sm:$0xff] %v286
    %303 = vst [vmem:[%s3 + $0x40] sm:$0xff] %v287
    %304 = vst [vmem:[%s3 + $0x48] sm:$0xff] %v288
    %305 = vst [vmem:[%s3 + $0x50] sm:$0xff] %v289
    %306 = vst [vmem:[%s3 + $0x58] sm:$0xff] %v290
    %307 = vst [vmem:[%s3 + $0x60] sm:$0xff] %v291
    %308 = vst [vmem:[%s3 + $0x68] sm:$0xff] %v292
    %309 = vst [vmem:[%s3 + $0x70] sm:$0xff] %v293
    %310 = vst [vmem:[%s3 + $0x78] sm:$0xff] %v294
  $region21: #{mlp_forward.1} parent=0 // pred_fallthru
    _
  // Predicated region
  $region22: #{mlp_forward.1} parent=0 // pred_check
    _
  $region23: #{mlp_forward.1} parent=0 // pred_check_branch
    %312 = sbr.rel (0) target = $region25
  $region24: #{mlp_forward.1} parent=0 // pred_region
    _
  $region25: #{mlp_forward.1} parent=0 // pred_fallthru
    _
  // Predicated region
  $region26: #{mlp_forward.1} parent=0 // pred_check
    _
  $region27: #{mlp_forward.1} parent=0 // pred_check_branch
    %314 = sbr.rel (0) target = $region29
  $region28: #{mlp_forward.1} parent=0 // pred_region
    _
  $region29: #{mlp_forward.1} parent=0 // pred_fallthru
    _

</llo_original>
